<compile_context>
chip_gen: v7x
topology: tpu7x:2x2x1
jax: 0.10.0
libtpu: 0.0.40
codegen_flags: <defaults>
</compile_context>

<pallas_src>
import functools

import jax
import jax.numpy as jnp
from jax import lax
from jax.experimental import pallas as pl
from jax.experimental.pallas import tpu as pltpu


def _round_up(x, m):
    return (x + m - 1) // m * m


# ---------------------------------------------------------------------------
# Kernel bodies. P holds exact 0/1 band entries; the 1/kernel_size scale is a
# single VPU multiply on the f32 accumulator before the cast.
# ---------------------------------------------------------------------------
def _pool_matmul_kernel(x_ref, p_ref, o_ref, *, inv_k):
    acc = jnp.dot(x_ref[...], p_ref[...], preferred_element_type=jnp.float32)
    o_ref[...] = (acc * inv_k).astype(o_ref.dtype)


def _pool_matmul_halo_kernel(xa_ref, xb_ref, pa_ref, pb_ref, o_ref, *, inv_k):
    acc = jnp.dot(xa_ref[...], pa_ref[...], preferred_element_type=jnp.float32)
    acc = acc + jnp.dot(xb_ref[...], pb_ref[...], preferred_element_type=jnp.float32)
    o_ref[...] = (acc * inv_k).astype(o_ref.dtype)


def _band_matrix(n_rows, n_cols, kernel_size, stride, row_offset, dtype):
    """B[r, c] = 1 if (row_offset + r) falls in output column c's window."""
    r = jnp.arange(n_rows, dtype=jnp.int32)[:, None] + row_offset
    c = jnp.arange(n_cols, dtype=jnp.int32)[None, :]
    start = c * stride
    return ((r >= start) & (r < start + kernel_size)).astype(dtype)


def _vmem_limit_bytes():
    cap = 64 * 1024 * 1024  # conservative fallback (v7x per-core VMEM)
    try:
        cap = int(pltpu.get_tpu_info().vmem_capacity_bytes)
    except Exception:
        pass
    return min((cap * 3) // 4, 96 * 1024 * 1024)


def _choose_row_tile(rows, per_row_bytes, resident_bytes, budget):
    if rows <= 8:
        return rows
    avail = max(budget - resident_bytes, per_row_bytes * 8)
    tile = min(rows, 1024, avail // max(per_row_bytes, 1))
    # Keep >= 2 grid steps when rows allow so the "parallel" row axis can be
    # sharded across v7x's two TensorCores.
    if tile >= rows and rows >= 16:
        tile = rows // 2
    # Snap to an MXU-friendly multiple (256 feeds v6e/v7x 256x256 MXU fully and
    # is a multiple of v5e's 128); fall back to the sublane multiple of 8.
    for m in (256, 128, 8):
        if tile >= m:
            return (tile // m) * m
    return 8


def avg_pool1d_pallas(x, kernel_size, stride=None, padding=0):
    """torch.nn.functional.avg_pool1d on an (N, C, L) tensor.

    Matches F.avg_pool1d defaults: count_include_pad=True, ceil_mode=False.
    """
    if stride is None:
        stride = kernel_size
    kernel_size, stride, padding = int(kernel_size), int(stride), int(padding)
    if padding > kernel_size // 2:
        raise ValueError("padding must be <= kernel_size // 2 (torch semantics)")
    n, c, l = x.shape
    l_out = (l + 2 * padding - kernel_size) // stride + 1
    if l_out < 1:
        raise ValueError("invalid pooling configuration")

    rows = n * c
    x_flat = x.reshape(rows, l)  # free reshape: rows -> sublanes, L -> lanes
    inv_k = 1.0 / float(kernel_size)
    itemsize = x.dtype.itemsize
    vmem_limit = _vmem_limit_bytes()
    tile_budget = (vmem_limit * 3) // 5  # ~60% of the scoped limit for tiles

    use_banded = (l_out >= 256) and (kernel_size - stride) <= 128 * stride

    if not use_banded:
        # --- small / short-output path: one dense band matrix -------------
        # Zero padding and count_include_pad are baked into P (no jnp.pad HBM
        # copy); output is written unpadded (last dim = full l_out).
        # TODO(synk): for l_out < 256 with very long L (huge stride), P grows
        # as L*l_out; add a reduction grid axis over L in that regime.
        p = _band_matrix(l, l_out, kernel_size, stride, padding, x.dtype)
        resident = 2 * l * l_out * itemsize            # P is double-buffered
        per_row = 2 * (l + l_out) * itemsize           # in + out, double-buffered
        row_tile = _choose_row_tile(rows, per_row, resident, tile_budget)
        grid = (pl.cdiv(rows, row_tile),)
        cost = pl.CostEstimate(
            flops=2 * rows * l * l_out,
            transcendentals=0,
            bytes_accessed=(rows * l + rows * l_out + l * l_out) * itemsize,
        )
        out_flat = pl.pallas_call(
            functools.partial(_pool_matmul_kernel, inv_k=inv_k),
            out_shape=jax.ShapeDtypeStruct((rows, l_out), x.dtype),
            grid_spec=pltpu.PrefetchScalarGridSpec(
                num_scalar_prefetch=0,
                grid=grid,
                in_specs=[
                    pl.BlockSpec((row_tile, l), lambda i: (i, 0)),
                    # Constant index_map -> P stays resident across grid steps.
                    pl.BlockSpec((l, l_out), lambda i: (0, 0)),
                ],
                out_specs=pl.BlockSpec((row_tile, l_out), lambda i: (i, 0)),
            ),
            compiler_params=pltpu.CompilerParams(
                dimension_semantics=("parallel",),
                vmem_limit_bytes=vmem_limit,
            ),
            cost_estimate=cost,
        )(x_flat, p)
        return out_flat.reshape(n, c, l_out)

    # --- banded / tiled path for long outputs -----------------------------
    tn = 128                       # output columns per tile (multiple of 128)
    lb = tn * stride               # aligned input window per output tile
    n_j = pl.cdiv(l_out, tn)
    halo = max(kernel_size - stride, 0)
    if halo == 0:
        hb = 0
    elif halo <= 128:
        hb = 128
    else:
        hb = lb                    # rare: kernel much wider than stride

    # Pre-pad so output tile j's window starts exactly at element j*lb.
    # TODO(synk): the pad is one extra HBM pass over x; a manual-DMA variant
    # with element-offset windows would avoid it.
    l_pad = _round_up(max(n_j * lb + hb, l + 2 * padding), 128)
    x_pad = jnp.pad(x_flat, ((0, 0), (padding, l_pad - padding - l)))

    p_a = _band_matrix(lb, tn, kernel_size, stride, 0, x.dtype)
    resident = 2 * lb * tn * itemsize
    per_row = 2 * (lb + hb + tn) * itemsize
    if hb:
        p_b = _band_matrix(hb, tn, kernel_size, stride, lb, x.dtype)
        resident += 2 * hb * tn * itemsize
    row_tile = _choose_row_tile(rows, per_row, resident, tile_budget)
    grid = (pl.cdiv(rows, row_tile), n_j)
    cost = pl.CostEstimate(
        flops=2 * rows * n_j * tn * (lb + hb),
        transcendentals=0,
        bytes_accessed=(rows * n_j * (lb + hb) + rows * l_out
                        + (lb + hb) * tn) * itemsize,
    )
    common = dict(
        out_shape=jax.ShapeDtypeStruct((rows, l_out), x.dtype),
        compiler_params=pltpu.CompilerParams(
            dimension_semantics=("parallel", "parallel"),
            vmem_limit_bytes=vmem_limit,
        ),
        cost_estimate=cost,
    )
    xa_spec = pl.BlockSpec((row_tile, lb), lambda i, j: (i, j))
    out_spec = pl.BlockSpec((row_tile, tn), lambda i, j: (i, j))

    if hb:
        blocks_per_halo = lb // hb
        xb_spec = pl.BlockSpec(
            (row_tile, hb), lambda i, j: (i, (j + 1) * blocks_per_halo))
        out_flat = pl.pallas_call(
            functools.partial(_pool_matmul_halo_kernel, inv_k=inv_k),
            grid_spec=pltpu.PrefetchScalarGridSpec(
                num_scalar_prefetch=0,
                grid=grid,
                in_specs=[
                    xa_spec,
                    xb_spec,
                    pl.BlockSpec((lb, tn), lambda i, j: (0, 0)),
                    pl.BlockSpec((hb, tn), lambda i, j: (0, 0)),
                ],
                out_specs=out_spec,
            ),
            **common,
        )(x_pad, x_pad, p_a, p_b)
    else:
        out_flat = pl.pallas_call(
            functools.partial(_pool_matmul_kernel, inv_k=inv_k),
            grid_spec=pltpu.PrefetchScalarGridSpec(
                num_scalar_prefetch=0,
                grid=grid,
                in_specs=[
                    xa_spec,
                    pl.BlockSpec((lb, tn), lambda i, j: (0, 0)),
                ],
                out_specs=out_spec,
            ),
            **common,
        )(x_pad, p_a)
    return out_flat.reshape(n, c, l_out)


def avg_pool1d_ref(x, kernel_size, stride=None, padding=0):
    """Pure-JAX reference matching F.avg_pool1d (count_include_pad=True)."""
    if stride is None:
        stride = kernel_size
    n, c, l = x.shape
    l_out = (l + 2 * padding - kernel_size) // stride + 1
    xp = jnp.pad(x, ((0, 0), (0, 0), (padding, padding)))
    acc = jnp.zeros((n, c, l_out), jnp.float32)
    for j in range(kernel_size):
        acc = acc + lax.slice_in_dim(
            xp, j, j + stride * (l_out - 1) + 1, stride, axis=2
        ).astype(jnp.float32)
    return (acc / float(kernel_size)).astype(x.dtype)


if __name__ == "__main__":
    # Module config: kernel_size=3, stride=2, padding=1 (satisfies p <= k//2).
    kernel_size, stride, padding = 3, 2, 1

    # Small shape consistent with avg_pool1d: (batch=2, channels=4, length=16).
    key = jax.random.PRNGKey(0)
    x = jax.random.normal(key, (2, 4, 16), dtype=jnp.float32)

    out = jax.block_until_ready(
        avg_pool1d_pallas(x, kernel_size, stride=stride, padding=padding))
    ref = avg_pool1d_ref(x, kernel_size, stride=stride, padding=padding)
    assert out.shape == ref.shape, (out.shape, ref.shape)
    assert jnp.allclose(out, ref, atol=1e-5, rtol=1e-5), "small-path mismatch"

    # Longer length (still tiny in bytes) to exercise the banded/tiled path.
    x2 = jax.random.normal(jax.random.PRNGKey(0), (2, 4, 2048), dtype=jnp.float32)
    out2 = jax.block_until_ready(
        avg_pool1d_pallas(x2, kernel_size, stride=stride, padding=padding))
    ref2 = avg_pool1d_ref(x2, kernel_size, stride=stride, padding=padding)
    assert out2.shape == ref2.shape, (out2.shape, ref2.shape)
    assert jnp.allclose(out2, ref2, atol=1e-5, rtol=1e-5), "banded-path mismatch"

    print("KERNEL_OK")
</pallas_src>

<mosaic_0001>
module attributes {stable_mosaic.version = 11 : i64} {
  func.func @_pool_matmul_kernel(%arg0: i32, %arg1: memref<8x16xf32, #tpu.memory_space<vmem>>, %arg2: memref<16x8xf32, #tpu.memory_space<vmem>>, %arg3: memref<8x8xf32, #tpu.memory_space<vmem>>) attributes {dimension_semantics = [#tpu.dimension_semantics<parallel>], iteration_bounds = array<i64: 1>, scalar_prefetch = 0 : i64, scratch_operands = 0 : i64, tpu.core_type = #tpu.core_type<tc>, window_params = [{transform_indices = @transform_0, window_bounds = array<i64: 8, 16>}, {pipeline_mode = #tpu.pipeline_mode<synchronous>, transform_indices = @transform_1, window_bounds = array<i64: 16, 8>}, {transform_indices = @transform_2, window_bounds = array<i64: 8, 8>}]} {
    %c0 = arith.constant 0 : index
    %c0_0 = arith.constant 0 : index
    %0 = vector.load %arg1[%c0, %c0_0] : memref<8x16xf32, #tpu.memory_space<vmem>>, vector<8x16xf32>
    %c0_1 = arith.constant 0 : index
    %c0_2 = arith.constant 0 : index
    %1 = vector.load %arg2[%c0_1, %c0_2] : memref<16x8xf32, #tpu.memory_space<vmem>>, vector<16x8xf32>
    %cst = arith.constant dense<0.000000e+00> : vector<8x8xf32>
    %2 = tpu.matmul %0, %1, %cst {dimension_numbers = #tpu.dot_dimension_numbers<[1], [0], [0], [1], [0, 0, 1, 1], [], []>} : vector<8x16xf32>, vector<16x8xf32>, vector<8x8xf32> -> vector<8x8xf32>
    %cst_3 = arith.constant 0.333333343 : f32
    %3 = vector.broadcast %cst_3 : f32 to vector<8x8xf32>
    %4 = arith.mulf %2, %3 : vector<8x8xf32>
    %c0_4 = arith.constant 0 : index
    %c0_5 = arith.constant 0 : index
    %5 = vector.load %arg3[%c0_4, %c0_5] : memref<8x8xf32, #tpu.memory_space<vmem>>, vector<8x8xf32>
    tpu.vector_store %arg3[%c0_4, %c0_5], %4 {strides = array<i32>} : memref<8x8xf32, #tpu.memory_space<vmem>>, vector<8x8xf32>,
    return
  }
  func.func @transform_0(%arg0: i32) -> (i32, i32) {
    %c0_i32 = arith.constant 0 : i32
    %c0_i32_0 = arith.constant 0 : i32
    return %arg0, %c0_i32 : i32, i32
  }
  func.func @transform_1(%arg0: i32) -> (i32, i32) {
    %c0_i32 = arith.constant 0 : i32
    %c0_i32_0 = arith.constant 0 : i32
    %c0_i32_1 = arith.constant 0 : i32
    return %c0_i32, %c0_i32_0 : i32, i32
  }
  func.func @transform_2(%arg0: i32) -> (i32, i32) {
    %c0_i32 = arith.constant 0 : i32
    %c0_i32_0 = arith.constant 0 : i32
    return %arg0, %c0_i32 : i32, i32
  }
}

</mosaic_0001>

<llo_original>
// kernel: tpu_custom_call.1
$region0: #{tpu_custom_call.1}
  #allocation0 [shape = 'u32[]', space=smem, size = 0x4, offset = 0x4, fixed_abs, tag = 'smem constant byte address 0x4 - core index']
  #allocation1 [shape = 'u32[144,128]{1,0:T(1,128)}', space=vmem, size = 0x12000, scoped, tag = 'internal scratch']
  %s0 = inlined_call_operand.vmem [shape: f32[8,16], index: 0, kind: input, shape index: {}]
  %s1 = inlined_call_operand.vmem [shape: f32[16,8], index: 1, kind: input, shape index: {}]
  %s2 = inlined_call_operand.hbm [shape: f32[8,8], index: 2, kind: output, shape index: {}]
  %s3 = sld [smem:[#allocation0]]
  $region18: #{tpu_custom_call.1} parent=0
    _
  %s5 = ssub.s32 1, %s3
  %s6 = scalar_select 0, %s5, %s3
  $region1: #{tpu_custom_call.1} parent=0
    #allocation2 [shape = 'u8[4096]{0}', space=vmem, size = 0x1000, scoped, tag = 'output window, operand 0, single buffered']
    #allocation3 [shape = 's32[1]{0}', space=sflag, size = 0x4, scoped, tag = 'scoped memory for tpu_custom_call.1']
    %7 = vsyncpa [#allocation3], 0
    // Predicated region
    $region2: #{tpu_custom_call.1} parent=1 // pred_check
      _
    $region3: #{tpu_custom_call.1} parent=1 // pred_check_branch
      %9 = sbr.rel (0) target = $region5
    $region4: #{tpu_custom_call.1} parent=1 // pred_region
      _
    $region5: #{tpu_custom_call.1} parent=1 // pred_fallthru
      _
    // Predicated region
    $region6: #{tpu_custom_call.1} parent=1 // pred_check
      _
    $region7: #{tpu_custom_call.1} parent=1 // pred_check_branch
      %11 = sbr.rel (0) target = $region9
    $region8: #{tpu_custom_call.1} parent=1 // pred_region
      _
    $region9: #{tpu_custom_call.1} parent=1 // pred_fallthru
      _
    %v12 = vld [vmem:[%s0] sm:$0xff]
    %v13 = vld [vmem:[%s1] sm:$0xff]
    %v14 = vld [vmem:[%s1 + $0x8] sm:$0xff]
    %vm15 = vcmask 130048
    %v17 = vsel %vm15, %v12, 0
    %19 = vmatprep.subr.mxu0 0.0
    %20 = vmatpush1.msra.mxu0 %v13
    %21 = vmatprep.subr.mxu0 0.0
    %22 = vmatpush1.msra.mxu0 %v14
    %23 = vmatprep.subr.mxu0 0.0
    %24 = vmatpush1.msra.mxu0 0.0
    %25 = vmatprep.subr.mxu0 0.0
    %26 = vmatpush1.msra.mxu0 0.0
    %27 = vmatprep.subr.mxu0 0.0
    %28 = vmatpush1.msra.mxu0 0.0
    %29 = vmatprep.subr.mxu0 0.0
    %30 = vmatpush1.msra.mxu0 0.0
    %31 = vmatprep.subr.mxu0 0.0
    %32 = vmatpush1.msra.mxu0 0.0
    %33 = vmatprep.subr.mxu0 0.0
    %34 = vmatpush1.msra.mxu0 0.0
    %35 = vmatprep.subr.mxu0 0.0
    %36 = vmatpush1.msra.mxu0 0.0
    %37 = vmatprep.subr.mxu0 0.0
    %38 = vmatpush1.msra.mxu0 0.0
    %39 = vmatprep.subr.mxu0 0.0
    %40 = vmatpush1.msra.mxu0 0.0
    %41 = vmatprep.subr.mxu0 0.0
    %42 = vmatpush1.msra.mxu0 0.0
    %43 = vmatprep.subr.mxu0 0.0
    %44 = vmatpush1.msra.mxu0 0.0
    %45 = vmatprep.subr.mxu0 0.0
    %46 = vmatpush1.msra.mxu0 0.0
    %47 = vmatprep.subr.mxu0 0.0
    %48 = vmatpush1.msra.mxu0 0.0
    %49 = vmatprep.subr.mxu0 0.0
    %50 = vmatpush1.msra.mxu0 0.0
    %51 = vmatprep.subr.mxu0 0.0
    %52 = vmatpush1.msra.mxu0 0.0
    %53 = vmatprep.subr.mxu0 0.0
    %54 = vmatpush1.msra.mxu0 0.0
    %55 = vmatprep.subr.mxu0 0.0
    %56 = vmatpush1.msra.mxu0 0.0
    %57 = vmatprep.subr.mxu0 0.0
    %58 = vmatpush1.msra.mxu0 0.0
    %59 = vmatprep.subr.mxu0 0.0
    %60 = vmatpush1.msra.mxu0 0.0
    %61 = vmatprep.subr.mxu0 0.0
    %62 = vmatpush1.msra.mxu0 0.0
    %63 = vmatprep.subr.mxu0 0.0
    %64 = vmatpush1.msra.mxu0 0.0
    %65 = vmatprep.subr.mxu0 0.0
    %66 = vmatpush1.msra.mxu0 0.0
    %67 = vmatprep.subr.mxu0 0.0
    %68 = vmatpush1.msra.mxu0 0.0
    %69 = vmatprep.subr.mxu0 0.0
    %70 = vmatpush1.msra.mxu0 0.0
    %71 = vmatprep.subr.mxu0 0.0
    %72 = vmatpush1.msra.mxu0 0.0
    %73 = vmatprep.subr.mxu0 0.0
    %74 = vmatpush1.msra.mxu0 0.0
    %75 = vmatprep.subr.mxu0 0.0
    %76 = vmatpush1.msra.mxu0 0.0
    %77 = vmatprep.subr.mxu0 0.0
    %78 = vmatpush1.msra.mxu0 0.0
    %79 = vmatprep.subr.mxu0 0.0
    %80 = vmatpush1.msra.mxu0 0.0
    %81 = vmatprep.subr.mxu0 0.0
    %82 = vmatpush1.msra.mxu0 0.0
    %83 = vmatprep.mubr.f32.mxu0 0.0
    %84 = vmatmul.mubr.f32.gmra.mrb[0].mxu0 %v17
    %v85 = vpop.f32.mrb[0].mxu0
    %v86 = vadd.f32 0.0, %v85
    %v87 = vpop.f32.mrb[0].mxu0
    %88 = vdwg.mxu0
    %v89 = vmul.f32 %v86, 0.33333334
    %vm90 = vcmask 64512
    %91 = vst.msk [vmem:[#allocation2] sm:$0xff] %vm90, %v89
    // Predicated region
    $region10: #{tpu_custom_call.1} parent=1 // pred_check
      _
    $region11: #{tpu_custom_call.1} parent=1 // pred_check_branch
      %93 = sbr.rel (0) target = $region13
    $region12: #{tpu_custom_call.1} parent=1 // pred_region
      %s95 = ssub.s32 128, 128
      %96 = vsyncadd [#allocation3], %s95
      %s98 = sshll.u32 [#allocation2], 4
      %s99 = int_to_ptr.vmem [resolvable:$true] %s98
      %101 = dma.vmem_to_hbm [thread:$0]  %s99, 128, %s2, [#allocation3]
    $region13: #{tpu_custom_call.1} parent=1 // pred_fallthru
      _
    // Predicated region
    $region14: #{tpu_custom_call.1} parent=1 // pred_check
      _
    $region15: #{tpu_custom_call.1} parent=1 // pred_check_branch
      %103 = sbr.rel (0) target = $region17
    $region16: #{tpu_custom_call.1} parent=1 // pred_region
      %104 = dma.done [#allocation3], 128
    $region17: #{tpu_custom_call.1} parent=1 // pred_fallthru
      _
    %105 = vsyncpa [#allocation3], 1

</llo_original>
